<compile_context>
chip_gen: v7x
topology: tpu7x:2x2x1
jax: 0.10.0
libtpu: 0.0.40
codegen_flags: <defaults>
</compile_context>

<pallas_src>
import jax
import jax.numpy as jnp
from jax.experimental import pallas as pl
from jax.experimental.pallas import tpu as pltpu

_LANES = 128


def _noop_kernel(a_ref, b_ref, x_ref, o_ref):
    # a_ref, b_ref: (1,) f32 scalars in SMEM. x_ref/o_ref: VMEM tiles.
    a = a_ref[0]
    b = b_ref[0]
    x = x_ref[...].astype(jnp.float32)
    o_ref[...] = (x * a + b).astype(o_ref.dtype)


def _device_kind():
    try:
        return jax.devices()[0].device_kind.lower()
    except Exception:  # pragma: no cover - defensive (e.g. no devices yet)
        return ""


def _tile_params(dtype):
    """Generation- and dtype-aware tiling parameters.

    Returns (max_tile_rows, sublane_multiple, two_cores).
    """
    kind = _device_kind()
    itemsize = jnp.dtype(dtype).itemsize
    packing = max(1, 4 // max(1, itemsize))
    sub = 8 * packing  # 8 rows f32, 16 bf16, 32 int8/fp8 (packed sublanes)

    # Per-tile byte budget: 4 MiB where scoped VMEM is 32 MiB (v6e, v7x),
    # 2 MiB otherwise (v5e's scoped default is 16 MiB). With in+out double
    # buffering this stays well inside the scoped limit on every generation,
    # so no vmem_limit_bytes override is required.
    if ("v6" in kind) or ("v7" in kind):
        tile_bytes = 4 << 20
    else:
        tile_bytes = 2 << 20

    max_rows = tile_bytes // (_LANES * itemsize)
    max_rows = max(sub, (max_rows // sub) * sub)

    two_cores = "v7" in kind  # 2 TensorCores per chip sharing HBM
    return max_rows, sub, two_cores


def _pallas_elementwise(x2d, a32, b32, block_shape, grid, out_dtype):
    return pl.pallas_call(
        _noop_kernel,
        out_shape=jax.ShapeDtypeStruct(x2d.shape, out_dtype),
        grid_spec=pltpu.PrefetchScalarGridSpec(
            num_scalar_prefetch=0,
            grid=grid,
            in_specs=[
                pl.BlockSpec(memory_space=pltpu.SMEM),   # a (1,) f32
                pl.BlockSpec(memory_space=pltpu.SMEM),   # b (1,) f32
                pl.BlockSpec(block_shape, lambda i: (i, 0)
                             if block_shape[1] == x2d.shape[1]
                             else (0, i)),
            ],
            out_specs=pl.BlockSpec(block_shape, lambda i: (i, 0)
                                   if block_shape[1] == x2d.shape[1]
                                   else (0, i)),
        ),
        compiler_params=pltpu.CompilerParams(
            dimension_semantics=("parallel",),
        ),
    )(a32, b32, x2d)


def _noop_2d(x2d, a32, b32, out_dtype):
    """y = x*a + b on a lane-dense (rows, 128) slab (n % 128 == 0 path)."""
    rows, lanes = x2d.shape
    max_rows, sub, two_cores = _tile_params(x2d.dtype)

    if rows <= sub:
        # Single block equal to the full array (allowed even if rows % sub != 0).
        tile_rows = rows
    else:
        tile_rows = min(max_rows, (rows // sub) * sub)
        if two_cores:
            # Ensure >= 2 blocks so both v7x TensorCores stream.
            half = (rows // 2 // sub) * sub
            if half >= sub:
                tile_rows = min(tile_rows, half)

    grid = (pl.cdiv(rows, tile_rows),)
    return _pallas_elementwise(x2d, a32, b32, (tile_rows, lanes), grid, out_dtype)


def _noop_1d(x1d, a32, b32, out_dtype):
    """y = x*a + b on a (1, n) view, n >= 128 and n % 128 != 0.

    Lane axis tiled in 128-multiples; Pallas masks the ragged last block.
    Avoids the old jnp.pad fallback (which doubled HBM traffic).
    """
    _, n = x1d.shape
    max_rows, _, two_cores = _tile_params(x1d.dtype)
    max_cols = max_rows * _LANES  # same per-tile byte budget as the 2D path

    tile_n = min(max_cols, (n // _LANES) * _LANES)
    if two_cores:
        half = (n // 2 // _LANES) * _LANES
        if half >= _LANES:
            tile_n = min(tile_n, half)

    grid = (pl.cdiv(n, tile_n),)
    return _pallas_elementwise(x1d, a32, b32, (1, tile_n), grid, out_dtype)


def noop_model_forward(x, a, b):
    """y = x * a + b, computed in a Pallas TPU kernel.

    x: any-shaped array (e.g. NCHW). a, b: shape (1,) f32 params.
    Output dtype follows PyTorch promotion with f32 params:
    promote_types(x.dtype, float32).
    """
    orig_shape = x.shape
    n = x.size
    out_dtype = jnp.promote_types(x.dtype, jnp.float32)

    a32 = a.astype(jnp.float32)
    b32 = b.astype(jnp.float32)

    if n == 0:
        return jnp.zeros(orig_shape, out_dtype)

    if n % _LANES == 0:
        # Common path: contiguous reshape (free), no pad, no trailing slice.
        rows = n // _LANES
        y2d = _noop_2d(x.reshape(rows, _LANES), a32, b32, out_dtype)
        return y2d.reshape(orig_shape)

    if n < _LANES:
        # Tiny tensor: a kernel launch is pure overhead; plain jnp is exact.
        return (x.astype(jnp.float32) * a32[0] + b32[0]).astype(out_dtype)

    # Ragged path: (1, n) view, 128-multiple lane tiles, masked last block.
    y1d = _noop_1d(x.reshape(1, n), a32, b32, out_dtype)
    return y1d.reshape(orig_shape)


if __name__ == "__main__":
    key = jax.random.PRNGKey(0)
    k_a, k_b, k_x = jax.random.split(key, 3)

    # Deterministic "randn(1)" parameter init (synthetic, not a checkpoint).
    a = jax.random.normal(k_a, (1,), dtype=jnp.float32)
    b = jax.random.normal(k_b, (1,), dtype=jnp.float32)

    # Small NCHW-like input, consistent with an arbitrary tensor fed to forward().
    x = jax.random.normal(k_x, (2, 4, 16, 16), dtype=jnp.float32)

    y = jax.block_until_ready(noop_model_forward(x, a, b))

    # Correctness vs pure-JAX reference of y = x * a + b.
    y_ref = x * a[0] + b[0]
    assert jnp.allclose(y, y_ref, atol=1e-6, rtol=1e-6), "mismatch vs reference"
    assert y.shape == x.shape
    assert y.dtype == jnp.promote_types(x.dtype, jnp.float32)

    # Also exercise the ragged (size % 128 != 0) path once, at a tiny shape.
    x2 = jax.random.normal(k_x, (3, 7, 13), dtype=jnp.float32)  # 273 elements
    y2 = jax.block_until_ready(noop_model_forward(x2, a, b))
    assert jnp.allclose(y2, x2 * a[0] + b[0], atol=1e-6, rtol=1e-6), "ragged mismatch"
    assert y2.shape == x2.shape

    print("KERNEL_OK")
</pallas_src>

<mosaic_0001>
module attributes {stable_mosaic.version = 11 : i64} {
  func.func @_noop_kernel(%arg0: i32, %arg1: memref<1xf32, #tpu.memory_space<smem>>, %arg2: memref<1xf32, #tpu.memory_space<smem>>, %arg3: memref<16x128xf32, #tpu.memory_space<vmem>>, %arg4: memref<16x128xf32, #tpu.memory_space<vmem>>) attributes {dimension_semantics = [#tpu.dimension_semantics<parallel>], iteration_bounds = array<i64: 1>, scalar_prefetch = 0 : i64, scratch_operands = 0 : i64, tpu.core_type = #tpu.core_type<tc>, window_params = [{transform_indices = @transform_0, window_bounds = array<i64: 1>}, {transform_indices = @transform_1, window_bounds = array<i64: 1>}, {transform_indices = @transform_2, window_bounds = array<i64: 16, 128>}, {transform_indices = @transform_3, window_bounds = array<i64: 16, 128>}]} {
    %c0 = arith.constant 0 : index
    %0 = memref.load %arg1[%c0] : memref<1xf32, #tpu.memory_space<smem>>
    %c0_0 = arith.constant 0 : index
    %1 = memref.load %arg2[%c0_0] : memref<1xf32, #tpu.memory_space<smem>>
    %c0_1 = arith.constant 0 : index
    %c0_2 = arith.constant 0 : index
    %2 = vector.load %arg3[%c0_1, %c0_2] : memref<16x128xf32, #tpu.memory_space<vmem>>, vector<16x128xf32>
    %3 = vector.broadcast %0 : f32 to vector<16x128xf32>
    %4 = arith.mulf %2, %3 : vector<16x128xf32>
    %5 = vector.broadcast %1 : f32 to vector<16x128xf32>
    %6 = arith.addf %4, %5 : vector<16x128xf32>
    %c0_3 = arith.constant 0 : index
    %c0_4 = arith.constant 0 : index
    %7 = vector.load %arg4[%c0_3, %c0_4] : memref<16x128xf32, #tpu.memory_space<vmem>>, vector<16x128xf32>
    tpu.vector_store %arg4[%c0_3, %c0_4], %6 {strides = array<i32>} : memref<16x128xf32, #tpu.memory_space<vmem>>, vector<16x128xf32>,
    return
  }
  func.func @transform_0(%arg0: i32) -> i32 {
    %c0_i32 = arith.constant 0 : i32
    %c0_i32_0 = arith.constant 0 : i32
    return %c0_i32 : i32
  }
  func.func @transform_1(%arg0: i32) -> i32 {
    %c0_i32 = arith.constant 0 : i32
    %c0_i32_0 = arith.constant 0 : i32
    return %c0_i32 : i32
  }
  func.func @transform_2(%arg0: i32) -> (i32, i32) {
    %c0_i32 = arith.constant 0 : i32
    %c0_i32_0 = arith.constant 0 : i32
    return %arg0, %c0_i32 : i32, i32
  }
  func.func @transform_3(%arg0: i32) -> (i32, i32) {
    %c0_i32 = arith.constant 0 : i32
    %c0_i32_0 = arith.constant 0 : i32
    return %arg0, %c0_i32 : i32, i32
  }
}

</mosaic_0001>

<llo_original>
// kernel: tpu_custom_call.1
$region0: #{tpu_custom_call.1}
  #allocation0 [shape = 'u32[]', space=smem, size = 0x4, offset = 0x4, fixed_abs, tag = 'smem constant byte address 0x4 - core index']
  #allocation1 [shape = 'u32[144,128]{1,0:T(1,128)}', space=vmem, size = 0x12000, scoped, tag = 'internal scratch']
  #allocation2 [shape = 'f32[1]{0:T(128)S(6)}', space=smem, size = 0x200, scoped, tag = 'scoped memory for tpu_custom_call.1']
  #allocation3 [shape = 'f32[1]{0:T(128)S(6)}', space=smem, size = 0x200, scoped, tag = 'scoped memory for tpu_custom_call.1']
  %s0 = inlined_call_operand.<no memory space> [shape: f32[1], index: 0, kind: input, shape index: {}]
  %s1 = inlined_call_operand.<no memory space> [shape: f32[1], index: 1, kind: input, shape index: {}]
  %s2 = inlined_call_operand.hbm [shape: f32[16,128], index: 2, kind: input, shape index: {}]
  %s3 = inlined_call_operand.hbm [shape: f32[16,128], index: 3, kind: output, shape index: {}]
  %s4 = sld [smem:[#allocation0]]
  $region26: #{tpu_custom_call.1} parent=0
    _
  %s6 = ssub.s32 1, %s4
  %s7 = scalar_select 0, %s6, %s4
  %8 = sst [smem:[#allocation2]] %s0
  %9 = sst [smem:[#allocation3]] %s1
  $region1: #{tpu_custom_call.1} parent=0
    #allocation4 [shape = 'u8[8192]{0}', space=vmem, size = 0x2000, scoped, tag = 'input window, operand 2, single buffered']
    #allocation5 [shape = 's32[1]{0}', space=sflag, size = 0x4, scoped, tag = 'scoped memory for tpu_custom_call.1']
    #allocation6 [shape = 's32[1]{0}', space=sflag, size = 0x4, scoped, tag = 'scoped memory for tpu_custom_call.1']
    #allocation7 [shape = 'u8[8192]{0}', space=vmem, size = 0x2000, scoped, tag = 'output window, operand 0, single buffered']
    %10 = vsyncpa [#allocation5], 0
    %11 = vsyncpa [#allocation6], 0
    // Predicated region
    $region2: #{tpu_custom_call.1} parent=1 // pred_check
      _
    $region3: #{tpu_custom_call.1} parent=1 // pred_check_branch
      %13 = sbr.rel (0) target = $region5
    $region4: #{tpu_custom_call.1} parent=1 // pred_region
      _
    $region5: #{tpu_custom_call.1} parent=1 // pred_fallthru
      _
    // Predicated region
    $region6: #{tpu_custom_call.1} parent=1 // pred_check
      _
    $region7: #{tpu_custom_call.1} parent=1 // pred_check_branch
      %15 = sbr.rel (0) target = $region9
    $region8: #{tpu_custom_call.1} parent=1 // pred_region
      _
    $region9: #{tpu_custom_call.1} parent=1 // pred_fallthru
      _
    // Predicated region
    $region10: #{tpu_custom_call.1} parent=1 // pred_check
      _
    $region11: #{tpu_custom_call.1} parent=1 // pred_check_branch
      %17 = sbr.rel (0) target = $region13
    $region12: #{tpu_custom_call.1} parent=1 // pred_region
      %s19 = ssub.s32 256, 256
      %20 = vsyncadd [#allocation5], %s19
      %s21 = sshll.u32 [#allocation4], 4
      %s22 = int_to_ptr.vmem [resolvable:$true] %s21
      %27 = dma.hbm_to_vmem [thread:$0]  %s2, 256, %s22, [#allocation5], 128, 128, 8
    $region13: #{tpu_custom_call.1} parent=1 // pred_fallthru
      _
    // Predicated region
    $region14: #{tpu_custom_call.1} parent=1 // pred_check
      _
    $region15: #{tpu_custom_call.1} parent=1 // pred_check_branch
      %29 = sbr.rel (0) target = $region17
    $region16: #{tpu_custom_call.1} parent=1 // pred_region
      %30 = dma.done [#allocation5], 256
    $region17: #{tpu_custom_call.1} parent=1 // pred_fallthru
      _
    %s31 = sld [smem:[#allocation2]]
    %s32 = sld [smem:[#allocation3]]
    %v33 = vld [vmem:[#allocation4] sm:$0xff]
    %v34 = vld [vmem:[#allocation4 + $0x8] sm:$0xff]
    %v35 = vstv %s31
    %v36 = vmul.f32 %v33, %v35
    %v37 = vmul.f32 %v34, %v35
    %v38 = vstv %s32
    %v39 = vadd.f32 %v36, %v38
    %v40 = vadd.f32 %v37, %v38
    %41 = vst [vmem:[#allocation7] sm:$0xff] %v39
    %42 = vst [vmem:[#allocation7 + $0x8] sm:$0xff] %v40
    // Predicated region
    $region18: #{tpu_custom_call.1} parent=1 // pred_check
      _
    $region19: #{tpu_custom_call.1} parent=1 // pred_check_branch
      %44 = sbr.rel (0) target = $region21
    $region20: #{tpu_custom_call.1} parent=1 // pred_region
      %s46 = ssub.s32 256, 256
      %47 = vsyncadd [#allocation6], %s46
      %s48 = sshll.u32 [#allocation7], 4
      %s49 = int_to_ptr.vmem [resolvable:$true] %s48
      %54 = dma.vmem_to_hbm [thread:$0]  %s49, 256, %s3, [#allocation6], 128, 128, 8
    $region21: #{tpu_custom_call.1} parent=1 // pred_fallthru
      _
    // Predicated region
    $region22: #{tpu_custom_call.1} parent=1 // pred_check
      _
    $region23: #{tpu_custom_call.1} parent=1 // pred_check_branch
      %56 = sbr.rel (0) target = $region25
    $region24: #{tpu_custom_call.1} parent=1 // pred_region
      %57 = dma.done [#allocation6], 256
    $region25: #{tpu_custom_call.1} parent=1 // pred_fallthru
      _
    %58 = vsyncpa [#allocation5], 1
    %59 = vsyncpa [#allocation6], 1

</llo_original>
